<compile_context>
chip_gen: v6e
topology: v6e:2x2x1
jax: 0.10.0
libtpu: 0.0.40
codegen_flags: <defaults>
</compile_context>

<pallas_src>
import functools

import jax
import jax.numpy as jnp
import numpy as np
from jax.experimental import pallas as pl
from jax.experimental.pallas import tpu as pltpu

_LANE = 128
_SUBLANE = 8
_NEG_BIG = -1e30  # padded logit columns -> exp() underflows to exactly 0 in f32


def _round_up(x: int, m: int) -> int:
    return ((x + m - 1) // m) * m


def _vmem_capacity_bytes() -> int:
    """Physical VMEM per TensorCore; conservative 64 MiB fallback (v7x)."""
    try:
        info = pltpu.get_tpu_info()
        return int(getattr(info, "vmem_capacity_bytes", 64 << 20))
    except Exception:
        return 64 << 20


def _is_multi_tensorcore() -> bool:
    """True on chips with >1 TensorCore sharing the grid (v4/v5p megacore, v7x)."""
    try:
        kind = jax.devices()[0].device_kind.lower()
    except Exception:
        return False
    return any(tag in kind for tag in ("v7", "v5p", "v4"))


def _make_mlp_kernel(num_layers: int):
    """Fused kernel: whole MLP forward for one batch tile.

    Ref order: x_ref, w0, b0, w1, b1, ..., w_{L-1}, b_{L-1}, out_ref
    Weights arrive pre-cast (bf16 by default); bias/activations/softmax are f32.
    """

    def kernel(x_ref, *refs):
        out_ref = refs[-1]
        params = refs[:-1]
        s = x_ref[...].astype(jnp.float32)              # matches s.float() in PyTorch
        for i in range(num_layers):
            W = params[2 * i][...]
            b = params[2 * i + 1][...]
            # bf16 inputs on the MXU, f32 accumulation.
            z = jnp.dot(s.astype(W.dtype), W,
                        preferred_element_type=jnp.float32) + b
            if i < num_layers - 1:
                s = jnp.maximum(z, 0.0)                 # activation_fun == ReLU
            else:
                # numerically-stable softmax over dim=1 (padded columns carry a
                # -1e30 bias, so their exp() is exactly 0 and the real-column
                # softmax is unchanged).  Exact divide: this output feeds
                # log-prob losses and must have rows summing to 1.
                z = z - jnp.max(z, axis=1, keepdims=True)
                e = jnp.exp(z)
                out_ref[...] = (e / jnp.sum(e, axis=1, keepdims=True)).astype(out_ref.dtype)

    return kernel


def pt_deep_forward(x, weights, biases, *, max_block_n: int = 2048,
                    matmul_dtype=jnp.bfloat16):
    """Pallas forward pass of PTDeep.  x: [N, D_in] float32."""
    assert len(weights) == len(biases) and len(weights) >= 1
    N, d_in = x.shape
    out_dim = weights[-1].shape[1]
    num_layers = len(weights)

    # ---- pad the final layer to a lane-dense (multiple of 128) output width ----
    out_padded = _round_up(out_dim, _LANE)
    weights_p = [jnp.asarray(W, jnp.float32) for W in weights]
    biases_p = [jnp.asarray(b, jnp.float32) for b in biases]
    if out_padded != out_dim:
        pad = out_padded - out_dim
        weights_p[-1] = jnp.pad(weights_p[-1], ((0, 0), (0, pad)))
        biases_p[-1] = jnp.pad(biases_p[-1], ((0, 0), (0, pad)),
                               constant_values=_NEG_BIG)
    # Pre-cast weights once (bf16 by default) so every grid step reuses them.
    weights_p = [W.astype(matmul_dtype) for W in weights_p]

    # ---- VMEM-budgeted batch tile ---------------------------------------------
    vmem_bytes = _vmem_capacity_bytes()
    param_bytes = sum(int(np.prod(W.shape)) * W.dtype.itemsize for W in weights_p) \
        + sum(int(np.prod(b.shape)) * 4 for b in biases_p)
    widths = [int(W.shape[1]) for W in weights_p]
    max_w = max([d_in] + widths)
    # per-row cost: x tile (f32, double-buffered) + out tile (f32, double-buffered)
    # + ~2 live f32 activation rows of the widest layer.
    per_row_bytes = 4 * (2 * d_in + 2 * out_padded + 2 * max_w)
    budget = min(vmem_bytes // 2, 64 << 20) - 2 * param_bytes
    # TODO(synk): if the weights themselves exceed the VMEM budget (very wide
    # layers), stream them with an extra grid axis / emit_pipeline instead of
    # forcing them resident; not needed for these layer sizes.
    budget = max(budget, per_row_bytes * _SUBLANE)
    block_n = min(max_block_n, budget // per_row_bytes)

    # Multi-TensorCore chips (v4/v5p/v7x): aim for >= 4 grid steps (2 per TC) so
    # each TC gets pipelined DMAs.  Single-TC v5e/v6e: keep one big tile.
    if _is_multi_tensorcore() and N >= 4 * _SUBLANE:
        block_n = min(block_n, _round_up(pl.cdiv(N, 4), _SUBLANE))

    if block_n >= N:
        block_n = N                                   # one full-extent block
    else:
        block_n = max(_SUBLANE, (block_n // _SUBLANE) * _SUBLANE)

    grid = (pl.cdiv(N, block_n),)

    # Tile only the batch dimension; weights/biases use constant index maps so the
    # same (fully VMEM-resident) block is reused on every grid step.
    in_specs = [pl.BlockSpec((block_n, d_in), lambda i: (i, 0))]
    flat_params = []
    for W, b in zip(weights_p, biases_p):
        in_specs.append(pl.BlockSpec(W.shape, lambda i: (0, 0)))
        in_specs.append(pl.BlockSpec(b.shape, lambda i: (0, 0)))
        flat_params.extend([W, b])

    out_spec = pl.BlockSpec((block_n, out_padded), lambda i: (i, 0))

    flops = 2 * N * sum(int(W.shape[0]) * int(W.shape[1]) for W in weights_p)
    bytes_accessed = (4 * int(np.prod(x.shape)) + 4 * N * out_padded + param_bytes)
    cost = pl.CostEstimate(flops=flops,
                           transcendentals=N * out_padded,
                           bytes_accessed=bytes_accessed)

    est_need = 2 * param_bytes + block_n * per_row_bytes
    vmem_limit = int(min(vmem_bytes, max(32 << 20, est_need + (8 << 20))))

    out_p = pl.pallas_call(
        _make_mlp_kernel(num_layers),
        out_shape=jax.ShapeDtypeStruct((N, out_padded), jnp.float32),
        grid_spec=pltpu.PrefetchScalarGridSpec(
            num_scalar_prefetch=0,
            grid=grid,
            in_specs=in_specs,
            out_specs=out_spec,
        ),
        compiler_params=pltpu.CompilerParams(
            dimension_semantics=("parallel",),
            vmem_limit_bytes=vmem_limit),
        cost_estimate=cost,
    )(jnp.asarray(x, jnp.float32), *flat_params)

    # Drop the lane-padding columns (cheap: out_dim << 128 and N is small here).
    return out_p[:, :out_dim]


def _reference_forward(x, weights, biases, matmul_dtype=jnp.bfloat16):
    """Pure-JAX reference with the same precision policy as the kernel."""
    s = jnp.asarray(x, jnp.float32)
    num_layers = len(weights)
    for i, (W, b) in enumerate(zip(weights, biases)):
        z = jnp.dot(s.astype(matmul_dtype), jnp.asarray(W, jnp.float32).astype(matmul_dtype),
                    preferred_element_type=jnp.float32) + jnp.asarray(b, jnp.float32)
        if i < num_layers - 1:
            s = jnp.maximum(z, 0.0)
        else:
            return jax.nn.softmax(z, axis=1)


if __name__ == "__main__":
    # layers config analogous to PTDeep([16, 32, 32, 10], torch.relu)
    layer_sizes = [16, 32, 32, 10]
    batch = 16

    key = jax.random.PRNGKey(0)
    keys = jax.random.split(key, len(layer_sizes))  # one per weight + one for x

    weights = []
    biases = []
    for i in range(len(layer_sizes) - 1):
        # torch.randn -> standard normal, float32; bias -> zeros (1, d_out)
        W = jax.random.normal(keys[i], (layer_sizes[i], layer_sizes[i + 1]),
                              dtype=jnp.float32)
        b = jnp.zeros((1, layer_sizes[i + 1]), dtype=jnp.float32)
        weights.append(W)
        biases.append(b)

    x = jax.random.normal(keys[-1], (batch, layer_sizes[0]), dtype=jnp.float32)

    out = pt_deep_forward(x, weights, biases)
    out = jax.block_until_ready(out)

    ref = _reference_forward(x, weights, biases)
    np.testing.assert_allclose(np.asarray(out), np.asarray(ref), rtol=2e-3, atol=2e-3)
    # rows of softmax output must sum to ~1 (exact divide in the kernel)
    np.testing.assert_allclose(np.asarray(out).sum(axis=1), np.ones(batch), atol=1e-4)

    print("KERNEL_OK")
</pallas_src>

<mosaic_0001>
module attributes {stable_mosaic.version = 11 : i64} {
  func.func @kernel(%arg0: i32, %arg1: memref<16x16xf32, #tpu.memory_space<vmem>>, %arg2: memref<16x32xbf16, #tpu.memory_space<vmem>>, %arg3: memref<1x32xf32, #tpu.memory_space<vmem>>, %arg4: memref<32x32xbf16, #tpu.memory_space<vmem>>, %arg5: memref<1x32xf32, #tpu.memory_space<vmem>>, %arg6: memref<32x128xbf16, #tpu.memory_space<vmem>>, %arg7: memref<1x128xf32, #tpu.memory_space<vmem>>, %arg8: memref<16x128xf32, #tpu.memory_space<vmem>>) attributes {dimension_semantics = [#tpu.dimension_semantics<parallel>], iteration_bounds = array<i64: 1>, scalar_prefetch = 0 : i64, scratch_operands = 0 : i64, tpu.core_type = #tpu.core_type<tc>, window_params = [{transform_indices = @transform_0, window_bounds = array<i64: 16, 16>}, {pipeline_mode = #tpu.pipeline_mode<synchronous>, transform_indices = @transform_1, window_bounds = array<i64: 16, 32>}, {pipeline_mode = #tpu.pipeline_mode<synchronous>, transform_indices = @transform_2, window_bounds = array<i64: 1, 32>}, {pipeline_mode = #tpu.pipeline_mode<synchronous>, transform_indices = @transform_3, window_bounds = array<i64: 32, 32>}, {pipeline_mode = #tpu.pipeline_mode<synchronous>, transform_indices = @transform_4, window_bounds = array<i64: 1, 32>}, {pipeline_mode = #tpu.pipeline_mode<synchronous>, transform_indices = @transform_5, window_bounds = array<i64: 32, 128>}, {pipeline_mode = #tpu.pipeline_mode<synchronous>, transform_indices = @transform_6, window_bounds = array<i64: 1, 128>}, {transform_indices = @transform_7, window_bounds = array<i64: 16, 128>}]} {
    %c0 = arith.constant 0 : index
    %c0_0 = arith.constant 0 : index
    %0 = vector.load %arg1[%c0, %c0_0] : memref<16x16xf32, #tpu.memory_space<vmem>>, vector<16x16xf32>
    %c0_1 = arith.constant 0 : index
    %c0_2 = arith.constant 0 : index
    %1 = vector.load %arg2[%c0_1, %c0_2] : memref<16x32xbf16, #tpu.memory_space<vmem>>, vector<16x32xbf16>
    %c0_3 = arith.constant 0 : index
    %c0_4 = arith.constant 0 : index
    %2 = vector.load %arg3[%c0_3, %c0_4] : memref<1x32xf32, #tpu.memory_space<vmem>>, vector<1x32xf32>
    %3 = arith.truncf %0 : vector<16x16xf32> to vector<16x16xbf16>
    %cst = arith.constant dense<0.000000e+00> : vector<16x32xf32>
    %4 = tpu.matmul %3, %1, %cst {dimension_numbers = #tpu.dot_dimension_numbers<[1], [0], [0], [1], [0, 0, 1, 1], [], []>} : vector<16x16xbf16>, vector<16x32xbf16>, vector<16x32xf32> -> vector<16x32xf32>
    %5 = vector.broadcast %2 : vector<1x32xf32> to vector<16x32xf32>
    %6 = arith.addf %4, %5 : vector<16x32xf32>
    %cst_5 = arith.constant 0.000000e+00 : f32
    %7 = vector.broadcast %cst_5 : f32 to vector<16x32xf32>
    %8 = arith.maximumf %6, %7 : vector<16x32xf32>
    %c0_6 = arith.constant 0 : index
    %c0_7 = arith.constant 0 : index
    %9 = vector.load %arg4[%c0_6, %c0_7] : memref<32x32xbf16, #tpu.memory_space<vmem>>, vector<32x32xbf16>
    %c0_8 = arith.constant 0 : index
    %c0_9 = arith.constant 0 : index
    %10 = vector.load %arg5[%c0_8, %c0_9] : memref<1x32xf32, #tpu.memory_space<vmem>>, vector<1x32xf32>
    %11 = arith.truncf %8 : vector<16x32xf32> to vector<16x32xbf16>
    %cst_10 = arith.constant dense<0.000000e+00> : vector<16x32xf32>
    %12 = tpu.matmul %11, %9, %cst_10 {dimension_numbers = #tpu.dot_dimension_numbers<[1], [0], [0], [1], [0, 0, 1, 1], [], []>} : vector<16x32xbf16>, vector<32x32xbf16>, vector<16x32xf32> -> vector<16x32xf32>
    %13 = vector.broadcast %10 : vector<1x32xf32> to vector<16x32xf32>
    %14 = arith.addf %12, %13 : vector<16x32xf32>
    %cst_11 = arith.constant 0.000000e+00 : f32
    %15 = vector.broadcast %cst_11 : f32 to vector<16x32xf32>
    %16 = arith.maximumf %14, %15 : vector<16x32xf32>
    %c0_12 = arith.constant 0 : index
    %c0_13 = arith.constant 0 : index
    %17 = vector.load %arg6[%c0_12, %c0_13] : memref<32x128xbf16, #tpu.memory_space<vmem>>, vector<32x128xbf16>
    %c0_14 = arith.constant 0 : index
    %c0_15 = arith.constant 0 : index
    %18 = vector.load %arg7[%c0_14, %c0_15] : memref<1x128xf32, #tpu.memory_space<vmem>>, vector<1x128xf32>
    %19 = arith.truncf %16 : vector<16x32xf32> to vector<16x32xbf16>
    %cst_16 = arith.constant dense<0.000000e+00> : vector<16x128xf32>
    %20 = tpu.matmul %19, %17, %cst_16 {dimension_numbers = #tpu.dot_dimension_numbers<[1], [0], [0], [1], [0, 0, 1, 1], [], []>} : vector<16x32xbf16>, vector<32x128xbf16>, vector<16x128xf32> -> vector<16x128xf32>
    %21 = vector.broadcast %18 : vector<1x128xf32> to vector<16x128xf32>
    %22 = arith.addf %20, %21 : vector<16x128xf32>
    %cst_17 = arith.constant dense<0xFF800000> : vector<16xf32>
    %23 = vector.multi_reduction <maximumf>, %22, %cst_17 [1] : vector<16x128xf32> to vector<16xf32>
    %24 = vector.shape_cast %23 : vector<16xf32> to vector<16x1xf32>
    %25 = vector.broadcast %24 : vector<16x1xf32> to vector<16x128xf32>
    %26 = arith.subf %22, %25 : vector<16x128xf32>
    %27 = math.exp %26 : vector<16x128xf32>
    %cst_18 = arith.constant dense<0.000000e+00> : vector<16xf32>
    %28 = vector.multi_reduction <add>, %27, %cst_18 [1] : vector<16x128xf32> to vector<16xf32>
    %29 = vector.shape_cast %28 : vector<16xf32> to vector<16x1xf32>
    %30 = vector.broadcast %29 : vector<16x1xf32> to vector<16x128xf32>
    %31 = arith.divf %27, %30 : vector<16x128xf32>
    %c0_19 = arith.constant 0 : index
    %c0_20 = arith.constant 0 : index
    %32 = vector.load %arg8[%c0_19, %c0_20] : memref<16x128xf32, #tpu.memory_space<vmem>>, vector<16x128xf32>
    tpu.vector_store %arg8[%c0_19, %c0_20], %31 {strides = array<i32>} : memref<16x128xf32, #tpu.memory_space<vmem>>, vector<16x128xf32>,
    return
  }
  func.func @transform_0(%arg0: i32) -> (i32, i32) {
    %c0_i32 = arith.constant 0 : i32
    %c0_i32_0 = arith.constant 0 : i32
    return %arg0, %c0_i32 : i32, i32
  }
  func.func @transform_1(%arg0: i32) -> (i32, i32) {
    %c0_i32 = arith.constant 0 : i32
    %c0_i32_0 = arith.constant 0 : i32
    %c0_i32_1 = arith.constant 0 : i32
    return %c0_i32, %c0_i32_0 : i32, i32
  }
  func.func @transform_2(%arg0: i32) -> (i32, i32) {
    %c0_i32 = arith.constant 0 : i32
    %c0_i32_0 = arith.constant 0 : i32
    %c0_i32_1 = arith.constant 0 : i32
    return %c0_i32, %c0_i32_0 : i32, i32
  }
  func.func @transform_3(%arg0: i32) -> (i32, i32) {
    %c0_i32 = arith.constant 0 : i32
    %c0_i32_0 = arith.constant 0 : i32
    %c0_i32_1 = arith.constant 0 : i32
    return %c0_i32, %c0_i32_0 : i32, i32
  }
  func.func @transform_4(%arg0: i32) -> (i32, i32) {
    %c0_i32 = arith.constant 0 : i32
    %c0_i32_0 = arith.constant 0 : i32
    %c0_i32_1 = arith.constant 0 : i32
    return %c0_i32, %c0_i32_0 : i32, i32
  }
  func.func @transform_5(%arg0: i32) -> (i32, i32) {
    %c0_i32 = arith.constant 0 : i32
    %c0_i32_0 = arith.constant 0 : i32
    %c0_i32_1 = arith.constant 0 : i32
    return %c0_i32, %c0_i32_0 : i32, i32
  }
  func.func @transform_6(%arg0: i32) -> (i32, i32) {
    %c0_i32 = arith.constant 0 : i32
    %c0_i32_0 = arith.constant 0 : i32
    %c0_i32_1 = arith.constant 0 : i32
    return %c0_i32, %c0_i32_0 : i32, i32
  }
  func.func @transform_7(%arg0: i32) -> (i32, i32) {
    %c0_i32 = arith.constant 0 : i32
    %c0_i32_0 = arith.constant 0 : i32
    return %arg0, %c0_i32 : i32, i32
  }
}

</mosaic_0001>

<llo_original>
// kernel: tpu_custom_call.1
$region0: #{tpu_custom_call.1}
  #allocation0 [shape = 'u32[]', space=smem, size = 0x4, offset = 0x4, fixed_abs, tag = 'smem constant byte address 0x4 - core index']
  #allocation1 [shape = 'u32[144,128]{1,0:T(1,128)}', space=vmem, size = 0x12000, scoped, tag = 'internal scratch']
  %s0 = inlined_call_operand.hbm [shape: f32[16,16], index: 0, kind: input, shape index: {}]
  %s1 = inlined_call_operand.hbm [shape: bf16[16,32], index: 1, kind: input, shape index: {}]
  %s2 = inlined_call_operand.vmem [shape: f32[1,32], index: 2, kind: input, shape index: {}]
  %s3 = inlined_call_operand.hbm [shape: bf16[32,32], index: 3, kind: input, shape index: {}]
  %s4 = inlined_call_operand.vmem [shape: f32[1,32], index: 4, kind: input, shape index: {}]
  %s5 = inlined_call_operand.hbm [shape: bf16[32,128], index: 5, kind: input, shape index: {}]
  %s6 = inlined_call_operand.vmem [shape: f32[1,128], index: 6, kind: input, shape index: {}]
  %s7 = inlined_call_operand.hbm [shape: f32[16,128], index: 7, kind: output, shape index: {}]
  %s8 = sld [smem:[#allocation0]]
  $region54: #{tpu_custom_call.1} parent=0
    _
  %s10 = ssub.s32 1, %s8
  %s11 = scalar_select 0, %s10, %s8
  $region1: #{tpu_custom_call.1} parent=0
    #allocation2 [shape = 'u8[8192]{0}', space=vmem, size = 0x2000, scoped, tag = 'input window, operand 0, single buffered']
    #allocation3 [shape = 's32[1]{0}', space=sflag, size = 0x4, scoped, tag = 'scoped memory for tpu_custom_call.1']
    #allocation4 [shape = 's32[1]{0}', space=sflag, size = 0x4, scoped, tag = 'scoped memory for tpu_custom_call.1']
    #allocation5 [shape = 'u8[4096]{0}', space=vmem, size = 0x1000, scoped, tag = 'input window, operand 1, single buffered']
    #allocation6 [shape = 's32[1]{0}', space=sflag, size = 0x4, scoped, tag = 'scoped memory for tpu_custom_call.1']
    #allocation7 [shape = 'u8[8192]{0}', space=vmem, size = 0x2000, scoped, tag = 'input window, operand 3, single buffered']
    #allocation8 [shape = 'u8[8192]{0}', space=vmem, size = 0x2000, scoped, tag = 'input window, operand 5, single buffered']
    #allocation9 [shape = 's32[1]{0}', space=sflag, size = 0x4, scoped, tag = 'scoped memory for tpu_custom_call.1']
    #allocation10 [shape = 'u8[8192]{0}', space=vmem, size = 0x2000, scoped, tag = 'output window, operand 0, single buffered']
    %12 = vsyncpa [#allocation3], 0
    %13 = vsyncpa [#allocation6], 0
    %14 = vsyncpa [#allocation9], 0
    %15 = vsyncpa [#allocation4], 0
    // Predicated region
    $region2: #{tpu_custom_call.1} parent=1 // pred_check
      _
    $region3: #{tpu_custom_call.1} parent=1 // pred_check_branch
      %17 = sbr.rel (0) target = $region5
    $region4: #{tpu_custom_call.1} parent=1 // pred_region
      %s19 = ssub.s32 256, 256
      %20 = vsyncadd [#allocation3], %s19
      %s21 = sshll.u32 [#allocation2], 4
      %s22 = int_to_ptr.vmem [resolvable:$true] %s21
      %27 = dma.hbm_to_vmem [thread:$0]  %s0, 256, %s22, [#allocation3], 128, 128, 8
    $region5: #{tpu_custom_call.1} parent=1 // pred_fallthru
      _
    // Predicated region
    $region6: #{tpu_custom_call.1} parent=1 // pred_check
      _
    $region7: #{tpu_custom_call.1} parent=1 // pred_check_branch
      %29 = sbr.rel (0) target = $region9
    $region8: #{tpu_custom_call.1} parent=1 // pred_region
      %s31 = ssub.s32 128, 128
      %32 = vsyncadd [#allocation6], %s31
      %s33 = sshll.u32 [#allocation5], 4
      %s34 = int_to_ptr.vmem [resolvable:$true] %s33
      %39 = dma.hbm_to_vmem [thread:$0]  %s1, 128, %s34, [#allocation6], 64, 64, 4
    $region9: #{tpu_custom_call.1} parent=1 // pred_fallthru
      _
    // Predicated region
    $region10: #{tpu_custom_call.1} parent=1 // pred_check
      _
    $region11: #{tpu_custom_call.1} parent=1 // pred_check_branch
      %41 = sbr.rel (0) target = $region13
    $region12: #{tpu_custom_call.1} parent=1 // pred_region
      _
    $region13: #{tpu_custom_call.1} parent=1 // pred_fallthru
      _
    // Predicated region
    $region14: #{tpu_custom_call.1} parent=1 // pred_check
      _
    $region15: #{tpu_custom_call.1} parent=1 // pred_check_branch
      %43 = sbr.rel (0) target = $region17
    $region16: #{tpu_custom_call.1} parent=1 // pred_region
      %s45 = ssub.s32 256, 256
      %46 = vsyncadd [#allocation6], %s45
      %s47 = sshll.u32 [#allocation7], 4
      %s48 = int_to_ptr.vmem [resolvable:$true] %s47
      %53 = dma.hbm_to_vmem [thread:$0]  %s3, 256, %s48, [#allocation6], 64, 64, 4
    $region17: #{tpu_custom_call.1} parent=1 // pred_fallthru
      _
    // Predicated region
    $region18: #{tpu_custom_call.1} parent=1 // pred_check
      _
    $region19: #{tpu_custom_call.1} parent=1 // pred_check_branch
      %55 = sbr.rel (0) target = $region21
    $region20: #{tpu_custom_call.1} parent=1 // pred_region
      _
    $region21: #{tpu_custom_call.1} parent=1 // pred_fallthru
      _
    // Predicated region
    $region22: #{tpu_custom_call.1} parent=1 // pred_check
      _
    $region23: #{tpu_custom_call.1} parent=1 // pred_check_branch
      %57 = sbr.rel (0) target = $region25
    $region24: #{tpu_custom_call.1} parent=1 // pred_region
      %s59 = ssub.s32 256, 256
      %60 = vsyncadd [#allocation9], %s59
      %s61 = sshll.u32 [#allocation8], 4
      %s62 = int_to_ptr.vmem [resolvable:$true] %s61
      %67 = dma.hbm_to_vmem [thread:$0]  %s5, 256, %s62, [#allocation9], 64, 64, 4
    $region25: #{tpu_custom_call.1} parent=1 // pred_fallthru
      _
    // Predicated region
    $region26: #{tpu_custom_call.1} parent=1 // pred_check
      _
    $region27: #{tpu_custom_call.1} parent=1 // pred_check_branch
      %69 = sbr.rel (0) target = $region29
    $region28: #{tpu_custom_call.1} parent=1 // pred_region
      _
    $region29: #{tpu_custom_call.1} parent=1 // pred_fallthru
      _
    // Predicated region
    $region30: #{tpu_custom_call.1} parent=1 // pred_check
      _
    $region31: #{tpu_custom_call.1} parent=1 // pred_check_branch
      %71 = sbr.rel (0) target = $region33
    $region32: #{tpu_custom_call.1} parent=1 // pred_region
      %72 = dma.done [#allocation3], 256
    $region33: #{tpu_custom_call.1} parent=1 // pred_fallthru
      _
    // Predicated region
    $region34: #{tpu_custom_call.1} parent=1 // pred_check
      _
    $region35: #{tpu_custom_call.1} parent=1 // pred_check_branch
      %74 = sbr.rel (0) target = $region37
    $region36: #{tpu_custom_call.1} parent=1 // pred_region
      %75 = dma.done [#allocation6], 128
    $region37: #{tpu_custom_call.1} parent=1 // pred_fallthru
      _
    // Predicated region
    $region38: #{tpu_custom_call.1} parent=1 // pred_check
      _
    $region39: #{tpu_custom_call.1} parent=1 // pred_check_branch
      %77 = sbr.rel (0) target = $region41
    $region40: #{tpu_custom_call.1} parent=1 // pred_region
      %78 = dma.done [#allocation6], 256
    $region41: #{tpu_custom_call.1} parent=1 // pred_fallthru
      _
    // Predicated region
    $region42: #{tpu_custom_call.1} parent=1 // pred_check
      _
    $region43: #{tpu_custom_call.1} parent=1 // pred_check_branch
      %80 = sbr.rel (0) target = $region45
    $region44: #{tpu_custom_call.1} parent=1 // pred_region
      %81 = dma.done [#allocation9], 256
    $region45: #{tpu_custom_call.1} parent=1 // pred_fallthru
      _
    %v83 = vld [vmem:[#allocation2] sm:$0xff]
    %v84 = vld [vmem:[#allocation2 + $0x8] sm:$0xff]
    %v85 = vld [vmem:[#allocation5] sm:$0xf]
    %v86 = vld [vmem:[#allocation5 + $0x4] sm:$0xf]
    %v87 = vld [vmem:[%s2] sm:$0x1]
    %v88 = vpack.c.bf16 %v84, %v83
    %v90 = vlaneseq
    %v91 = vshrl.u32 %v90, 7
    %v92 = vsub.s32 0, %v91
    %v93 = vrot.slane %v87, %v92
    %v97 = vunpack.c.l.b16 %v85
    %v98 = vunpack.c.l.b16 %v86
    %v99 = vpack.c.b16 %v98, %v97
    %vm101 = vcmask 130048
    %v103 = vsel %vm101, %v88, 0
    %105 = vmatprep.subr.bf16.mxu0 0
    %106 = vmatpush1.bf16.msra.mxu0 0
    %107 = vmatprep.subr.bf16.mxu0 0
    %108 = vmatpush1.bf16.msra.mxu0 0
    %109 = vmatprep.subr.bf16.mxu0 0
    %110 = vmatpush1.bf16.msra.mxu0 0
    %111 = vmatprep.subr.bf16.mxu0 0
    %112 = vmatpush1.bf16.msra.mxu0 0
    %113 = vmatprep.subr.bf16.mxu0 0
    %114 = vmatpush1.bf16.msra.mxu0 0
    %115 = vmatprep.subr.bf16.mxu0 0
    %116 = vmatpush1.bf16.msra.mxu0 0
    %117 = vmatprep.subr.bf16.mxu0 0
    %118 = vmatpush1.bf16.msra.mxu0 0
    %119 = vmatprep.subr.bf16.mxu0 0
    %120 = vmatpush1.bf16.msra.mxu0 %v99
    %121 = vmatprep.subr.bf16.mxu0 0
    %122 = vmatpush2.bf16.msra.mxu0 0
    %123 = vmatprep.subr.bf16.mxu0 0
    %124 = vmatpush2.bf16.msra.mxu0 0
    %125 = vmatprep.subr.bf16.mxu0 0
    %126 = vmatpush2.bf16.msra.mxu0 0
    %127 = vmatprep.subr.bf16.mxu0 0
    %128 = vmatpush2.bf16.msra.mxu0 0
    %129 = vmatprep.subr.bf16.mxu0 0
    %130 = vmatpush2.bf16.msra.mxu0 0
    %131 = vmatprep.subr.bf16.mxu0 0
    %132 = vmatpush2.bf16.msra.mxu0 0
    %133 = vmatprep.subr.bf16.mxu0 0
    %134 = vmatpush2.bf16.msra.mxu0 0
    %135 = vmatprep.subr.bf16.mxu0 0
    %136 = vmatpush2.bf16.msra.mxu0 0
    %137 = vmatprep.mubr.bf16.mxu0 0
    %138 = vmatmul.mubr.bf16.gmra.mxu0 %v103
    %v139 = vpop.f32.mrf.mxu0
    %v140 = vadd.f32 %v93, %v139
    %v141 = vpop.f32.mrf.mxu0
    %v142 = vpop.f32.mrf.mxu0
    %v143 = vadd.f32 %v93, %v142
    %v144 = vpop.f32.mrf.mxu0
    %145 = vdwg.mxu0
    %v146 = vmax.f32 %v140, 0.0
    %v147 = vmax.f32 %v143, 0.0
    %v148 = vld [vmem:[#allocation7] sm:$0xf]
    %v149 = vld [vmem:[#allocation7 + $0x4] sm:$0xf]
    %v150 = vld [vmem:[#allocation7 + $0x8] sm:$0xf]
    %v151 = vld [vmem:[#allocation7 + $0xc] sm:$0xf]
    %v152 = vld [vmem:[%s4] sm:$0x1]
    %v153 = vpack.c.bf16 %v147, %v146
    %v155 = vlaneseq
    %v156 = vshrl.u32 %v155, 7
    %v157 = vsub.s32 0, %v156
    %v158 = vrot.slane %v152, %v157
    %v164 = vunpack.c.l.b16 %v148
    %v165 = vunpack.c.l.b16 %v149
    %v166 = vunpack.c.l.b16 %v150
    %v167 = vunpack.c.l.b16 %v151
    %v168 = vpack.c.b16 %v165, %v164
    %v169 = vpack.c.b16 %v167, %v166
    %vm172 = vcmask 261120
    %v174 = vsel %vm172, %v153, 0
    %176 = vmatprep.subr.bf16.mxu0 0
    %177 = vmatpush1.bf16.msra.mxu0 0
    %178 = vmatprep.subr.bf16.mxu0 0
    %179 = vmatpush1.bf16.msra.mxu0 0
    %180 = vmatprep.subr.bf16.mxu0 0
    %181 = vmatpush1.bf16.msra.mxu0 0
    %182 = vmatprep.subr.bf16.mxu0 0
    %183 = vmatpush1.bf16.msra.mxu0 0
    %184 = vmatprep.subr.bf16.mxu0 0
    %185 = vmatpush1.bf16.msra.mxu0 0
    %186 = vmatprep.subr.bf16.mxu0 0
    %187 = vmatpush1.bf16.msra.mxu0 0
    %188 = vmatprep.subr.bf16.mxu0 0
    %189 = vmatpush1.bf16.msra.mxu0 %v169
    %190 = vmatprep.subr.bf16.mxu0 0
    %191 = vmatpush1.bf16.msra.mxu0 %v168
    %192 = vmatprep.subr.bf16.mxu0 0
    %193 = vmatpush2.bf16.msra.mxu0 0
    %194 = vmatprep.subr.bf16.mxu0 0
    %195 = vmatpush2.bf16.msra.mxu0 0
    %196 = vmatprep.subr.bf16.mxu0 0
    %197 = vmatpush2.bf16.msra.mxu0 0
    %198 = vmatprep.subr.bf16.mxu0 0
    %199 = vmatpush2.bf16.msra.mxu0 0
    %200 = vmatprep.subr.bf16.mxu0 0
    %201 = vmatpush2.bf16.msra.mxu0 0
    %202 = vmatprep.subr.bf16.mxu0 0
    %203 = vmatpush2.bf16.msra.mxu0 0
    %204 = vmatprep.subr.bf16.mxu0 0
    %205 = vmatpush2.bf16.msra.mxu0 0
    %206 = vmatprep.subr.bf16.mxu0 0
    %207 = vmatpush2.bf16.msra.mxu0 0
    %208 = vmatprep.mubr.bf16.mxu0 0
    %209 = vmatmul.mubr.bf16.gmra.mxu0 %v174
    %v210 = vpop.f32.mrf.mxu0
    %v211 = vadd.f32 %v158, %v210
    %v212 = vpop.f32.mrf.mxu0
    %v213 = vpop.f32.mrf.mxu0
    %v214 = vadd.f32 %v158, %v213
    %v215 = vpop.f32.mrf.mxu0
    %216 = vdwg.mxu0
    %v217 = vmax.f32 %v211, 0.0
    %v218 = vmax.f32 %v214, 0.0
    %v219 = vld [vmem:[#allocation8] sm:$0xf]
    %v220 = vld [vmem:[#allocation8 + $0x4] sm:$0xf]
    %v221 = vld [vmem:[#allocation8 + $0x8] sm:$0xf]
    %v222 = vld [vmem:[#allocation8 + $0xc] sm:$0xf]
    %v223 = vld [vmem:[%s6] sm:$0x1]
    %v224 = vpack.c.bf16 %v218, %v217
    %v226 = vlaneseq
    %v227 = vshrl.u32 %v226, 7
    %v228 = vsub.s32 0, %v227
    %v229 = vrot.slane %v223, %v228
    %v235 = vunpack.c.l.b16 %v219
    %v236 = vunpack.c.l.b16 %v220
    %v237 = vunpack.c.l.b16 %v221
    %v238 = vunpack.c.l.b16 %v222
    %v239 = vpack.c.b16 %v236, %v235
    %v240 = vpack.c.b16 %v238, %v237
    %v244 = vsel %vm172, %v224, 0
    %246 = vmatprep.subr.bf16.mxu0 0
    %247 = vmatpush1.bf16.msra.mxu0 0
    %248 = vmatprep.subr.bf16.mxu0 0
    %249 = vmatpush1.bf16.msra.mxu0 0
    %250 = vmatprep.subr.bf16.mxu0 0
    %251 = vmatpush1.bf16.msra.mxu0 0
    %252 = vmatprep.subr.bf16.mxu0 0
    %253 = vmatpush1.bf16.msra.mxu0 0
    %254 = vmatprep.subr.bf16.mxu0 0
    %255 = vmatpush1.bf16.msra.mxu0 0
    %256 = vmatprep.subr.bf16.mxu0 0
    %257 = vmatpush1.bf16.msra.mxu0 0
    %258 = vmatprep.subr.bf16.mxu0 0
    %259 = vmatpush1.bf16.msra.mxu0 %v240
    %260 = vmatprep.subr.bf16.mxu0 0
    %261 = vmatpush1.bf16.msra.mxu0 %v239
    %262 = vmatprep.subr.bf16.mxu0 0
    %263 = vmatpush2.bf16.msra.mxu0 0
    %264 = vmatprep.subr.bf16.mxu0 0
    %265 = vmatpush2.bf16.msra.mxu0 0
    %266 = vmatprep.subr.bf16.mxu0 0
    %267 = vmatpush2.bf16.msra.mxu0 0
    %268 = vmatprep.subr.bf16.mxu0 0
    %269 = vmatpush2.bf16.msra.mxu0 0
    %270 = vmatprep.subr.bf16.mxu0 0
    %271 = vmatpush2.bf16.msra.mxu0 0
    %272 = vmatprep.subr.bf16.mxu0 0
    %273 = vmatpush2.bf16.msra.mxu0 0
    %274 = vmatprep.subr.bf16.mxu0 0
    %275 = vmatpush2.bf16.msra.mxu0 0
    %276 = vmatprep.subr.bf16.mxu0 0
    %277 = vmatpush2.bf16.msra.mxu0 0
    %278 = vmatprep.mubr.bf16.mxu0 0
    %279 = vmatmul.mubr.bf16.gmra.mxu0 %v244
    %v280 = vpop.f32.mrf.mxu0
    %v281 = vadd.f32 %v229, %v280
    %v282 = vpop.f32.mrf.mxu0
    %v283 = vpop.f32.mrf.mxu0
    %v284 = vadd.f32 %v229, %v283
    %v285 = vpop.f32.mrf.mxu0
    %286 = vdwg.mxu0
    %287 = vmax.xlane.f32.xlu0 %v281
    %v288 = vpop.xlane.xlu0 %287
    %289 = vmax.xlane.f32.xlu0 %v284
    %v290 = vpop.xlane.xlu0 %289
    %v291 = vsub.f32 %v281, %v288
    %v292 = vsub.f32 %v284, %v290
    %v293 = vmul.f32 %v291, 1.442695
    %v294 = vpow.pop %v293
    %v295 = vmul.f32 %v292, 1.442695
    %v296 = vpow.pop %v295
    %297 = vadd.xlane.f32.xlu0 %v294
    %v298 = vpop.xlane.xlu0 %297
    %299 = vadd.xlane.f32.xlu0 %v296
    %v300 = vpop.xlane.xlu0 %299
    %v301 = vrcp.pop %v298
    %v302 = vmul.f32 %v294, %v301
    %v303 = vrcp.pop %v300
    %v304 = vmul.f32 %v296, %v303
    %305 = vst [vmem:[#allocation10] sm:$0xff] %v302
    %306 = vst [vmem:[#allocation10 + $0x8] sm:$0xff] %v304
    // Predicated region
    $region46: #{tpu_custom_call.1} parent=1 // pred_check
      _
    $region47: #{tpu_custom_call.1} parent=1 // pred_check_branch
      %308 = sbr.rel (0) target = $region49
    $region48: #{tpu_custom_call.1} parent=1 // pred_region
      %s310 = ssub.s32 256, 256
      %311 = vsyncadd [#allocation4], %s310
      %s312 = sshll.u32 [#allocation10], 4
      %s313 = int_to_ptr.vmem [resolvable:$true] %s312
      %318 = dma.vmem_to_hbm [thread:$0]  %s313, 256, %s7, [#allocation4], 128, 128, 8
    $region49: #{tpu_custom_call.1} parent=1 // pred_fallthru
      _
    // Predicated region
    $region50: #{tpu_custom_call.1} parent=1 // pred_check
      _
    $region51: #{tpu_custom_call.1} parent=1 // pred_check_branch
      %320 = sbr.rel (0) target = $region53
    $region52: #{tpu_custom_call.1} parent=1 // pred_region
      %321 = dma.done [#allocation4], 256
    $region53: #{tpu_custom_call.1} parent=1 // pred_fallthru
      _
    %322 = vsyncpa [#allocation3], 1
    %323 = vsyncpa [#allocation6], 1
    %324 = vsyncpa [#allocation9], 1
    %325 = vsyncpa [#allocation4], 1

</llo_original>
